<compile_context>
chip_gen: v6e
topology: v6e:2x2x1
jax: 0.10.0
libtpu: 0.0.40
codegen_flags: <defaults>
</compile_context>

<pallas_src>
import functools

import jax
import jax.numpy as jnp
from jax.experimental import pallas as pl
from jax.experimental.pallas import tpu as pltpu


LOSS_WEIGHT = (1.0, 0.5, 0.5)


def _hms_loss_kernel(y_ref, t_ref, ysed_ref, tsed_ref, out_ref,
                     kl_acc, sed_acc, nnz_acc, *,
                     ratio, tile_p, inv_b, inv_bc, w0, w1, w2):
    step = pl.program_id(0)
    last = pl.num_programs(0) - 1

    # ---- step 0: fused KLDiv(batchmean) + auxiliary BCE(mean) over (B, C_kl)
    #      and accumulator init.  y/target blocks use constant index maps so
    #      they are DMA'd once and stay resident across the grid. -------------
    @pl.when(step == 0)
    def _init():
        y = y_ref[...].astype(jnp.float32)                 # (B, C_kl)
        t = t_ref[...].astype(jnp.float32)                 # (B, C_kl)
        z = y - jnp.max(y, axis=1, keepdims=True)
        logp = z - jnp.log(jnp.sum(jnp.exp(z), axis=1, keepdims=True))
        xlogy = jnp.where(t > 0.0, t * jnp.log(jnp.where(t > 0.0, t, 1.0)), 0.0)
        # log(1+u) instead of log1p: u = exp(-|y|) is not near the cancellation
        # regime here and it keeps the elementwise set to exp/log only.
        bce = jnp.maximum(y, 0.0) - y * t + jnp.log(1.0 + jnp.exp(-jnp.abs(y)))
        # one elementwise pass, one reduce; static normalizers baked in.
        kl_aux = jnp.sum((w0 * inv_b) * (xlogy - t * logp) + (w1 * inv_bc) * bce)
        kl_acc[...] = kl_aux.reshape(1, 1)
        sed_acc[...] = jnp.zeros((1, 1), jnp.float32)
        nnz_acc[0] = 0

    # ---- SED BCE for this predicted-time tile --------------------------------
    # y_sed tile is (B, C_sed, tP): time on the 128-lane axis, so the
    # transcendental part A(x) = max(x,0) + log(1+exp(-|x|)) is lane-dense and
    # evaluated only once per *predicted* frame (nearest upsample with an
    # integer ratio is pure replication and BCE is linear in the target; the
    # upsampled (B*T, C_sed) intermediate never exists).
    ys = ysed_ref[...].astype(jnp.float32)                          # (B, C, tP)
    a = jnp.maximum(ys, 0.0) + jnp.log(1.0 + jnp.exp(-jnp.abs(ys)))  # (B, C, tP)

    batch, c_sed, _ = ys.shape
    m_acc = jnp.zeros((batch, tile_p, 1), jnp.float32)       # sum_j mask_j
    g_acc = jnp.zeros((batch, tile_p, c_sed), jnp.float32)   # sum_j tgt_j*mask_j
    nz_acc = jnp.zeros((batch, tile_p, 1), jnp.int32)        # nonzero-frame count
    # Static unroll over the r interp phases: the live set is only the three
    # vector accumulators (per-phase temporaries die each iteration), so the
    # Python loop keeps LLO visibility without register pressure.
    for j in range(ratio):
        # target frames t = j, j+r, ... map to pred frame t//r: a static
        # sublane-strided read of the resident target tile.
        ts_j = tsed_ref[:, pl.ds(j, tile_p, ratio), :].astype(jnp.float32)
        mask_j = jnp.sum(ts_j, axis=2, keepdims=True)               # (B, tP, 1)
        m_acc = m_acc + mask_j
        g_acc = g_acc + ts_j * mask_j
        nz_acc = nz_acc + (mask_j != 0.0).astype(jnp.int32)

    # One small transpose of the r-times-reduced moments (not of the P*C
    # activations), one fused elementwise pass, one full reduce per tile:
    #   sum BCE*mask = sum A*M - sum x*G
    m_t = jnp.swapaxes(m_acc, 1, 2)                                 # (B, 1, tP)
    g_t = jnp.swapaxes(g_acc, 1, 2)                                 # (B, C, tP)
    sed_tile = jnp.sum(a * m_t - ys * g_t)
    sed_acc[...] += sed_tile.reshape(1, 1)
    nnz_acc[0] = nnz_acc[0] + jnp.sum(nz_acc)                       # exact int32

    # ---- finalize -------------------------------------------------------------
    @pl.when(step == last)
    def _fin():
        # Precondition (same as the PyTorch module): at least one target frame
        # is nonzero, otherwise both implementations divide by zero.
        nnz_v = jnp.full((1, 1), nnz_acc[0]).astype(jnp.float32)
        inv_nnz = pl.reciprocal(nnz_v, approx=True)   # EUP slot, otherwise idle
        inv_nnz = inv_nnz * (2.0 - nnz_v * inv_nnz)   # one Newton step -> ~f32 acc
        out_ref[...] = kl_acc[...] + w2 * sed_acc[...] * inv_nnz


def _pick_time_tile(t_pred):
    # Largest lane-aligned tile that divides the predicted-time axis; tiny
    # inputs fall back to a single full-extent tile.
    for cand in (512, 256, 128):
        if t_pred % cand == 0:
            return cand
    return t_pred


def hms_sed_1d_loss(y, y_sed, target, target_sed, loss_weight=LOSS_WEIGHT):
    """Fused HMSSED1DLoss forward.

    target_sed may be float32 / bfloat16 / int8 (binary labels): the kernel
    casts to f32, so narrow dtypes simply cut the dominant HBM stream.
    """
    b, c_kl = y.shape
    _, c_sed, t_pred = y_sed.shape
    _, time_steps, c_sed2 = target_sed.shape
    assert c_sed == c_sed2
    assert time_steps % t_pred == 0, (
        "fused kernel specializes nearest-interp to integer T/T_pred ratios")
    # TODO(synk): non-integer nearest-interp ratios need a static-gather path
    # (floor(t*T_pred/T) indexing of the VMEM ref) instead of replication.
    ratio = time_steps // t_pred
    tile_p = _pick_time_tile(t_pred)
    num_tiles = t_pred // tile_p

    kernel = functools.partial(
        _hms_loss_kernel,
        ratio=ratio, tile_p=tile_p,
        inv_b=1.0 / b, inv_bc=1.0 / (b * c_kl),
        w0=float(loss_weight[0]), w1=float(loss_weight[1]),
        w2=float(loss_weight[2]),
    )
    out = pl.pallas_call(
        kernel,
        out_shape=jax.ShapeDtypeStruct((1, 1), jnp.float32),
        grid=(num_tiles,),
        in_specs=[
            pl.BlockSpec((b, c_kl), lambda i: (0, 0)),                      # y
            pl.BlockSpec((b, c_kl), lambda i: (0, 0)),                      # target
            pl.BlockSpec((b, c_sed, tile_p), lambda i: (0, 0, i)),          # y_sed tile
            pl.BlockSpec((b, ratio * tile_p, c_sed), lambda i: (0, i, 0)),  # target_sed tile
        ],
        out_specs=pl.BlockSpec((1, 1), lambda i: (0, 0)),
        scratch_shapes=[
            pltpu.VMEM((1, 1), jnp.float32),   # kl + aux partial
            pltpu.VMEM((1, 1), jnp.float32),   # sed partial
            pltpu.SMEM((1,), jnp.int32),       # nonzero-frame count (exact)
        ],
        compiler_params=pltpu.CompilerParams(
            # Reduction over pred-time tiles; give the double-buffered target
            # tiles scoped-VMEM headroom (v5e default is only 16 MiB) while
            # staying well under v7x's 64 MiB physical VMEM.
            dimension_semantics=("arbitrary",),
            vmem_limit_bytes=48 * 1024 * 1024,
        ),
    )(y, target, y_sed, target_sed)
    return out[0, 0]


# ---------------------------- pure-JAX reference -----------------------------

def _nearest_interp_1d(x, out_len):
    """PyTorch F.interpolate(mode='nearest') on (B, C, L) -> (B, C, out_len)."""
    L = x.shape[-1]
    idx = (jnp.arange(out_len) * L) // out_len
    return x[:, :, idx]


def _reference(y, y_sed, target, target_sed, loss_weight=LOSS_WEIGHT):
    b, time_steps, num_classes = target_sed.shape
    logp = jax.nn.log_softmax(y, axis=1)
    xlogy = jnp.where(target > 0,
                      target * jnp.log(jnp.where(target > 0, target, 1.0)), 0.0)
    kl = jnp.sum(xlogy - target * logp) / y.shape[0]
    bce = jnp.maximum(y, 0.0) - y * target + jnp.log1p(jnp.exp(-jnp.abs(y)))
    aux = jnp.mean(bce)
    ysf = jnp.transpose(_nearest_interp_1d(y_sed, time_steps),
                        (0, 2, 1)).reshape(-1, num_classes)
    tsf = target_sed.reshape(-1, num_classes)
    mask = jnp.sum(tsf, axis=1, keepdims=True)
    sed_bce = jnp.maximum(ysf, 0.0) - ysf * tsf + jnp.log1p(jnp.exp(-jnp.abs(ysf)))
    sed = jnp.sum(sed_bce * mask) / jnp.sum(mask != 0)
    return kl * loss_weight[0] + aux * loss_weight[1] + sed * loss_weight[2]


if __name__ == "__main__":
    key = jax.random.PRNGKey(0)
    k1, k2, k3, k4, k5 = jax.random.split(key, 5)

    B = 2                # batch
    C_KL = 6             # HMS vote classes
    C_SED = 6            # SED classes
    T_PRED = 8           # predicted SED time steps (before nearest upsample)
    T = 16               # target SED time steps

    y = jax.random.normal(k1, (B, C_KL), dtype=jnp.float32)
    target = jax.nn.softmax(jax.random.normal(k2, (B, C_KL), dtype=jnp.float32),
                            axis=1)

    y_sed = jax.random.normal(k3, (B, C_SED, T_PRED), dtype=jnp.float32)
    # binary SED labels; zero out half the frames so the masked/nonzero-count
    # path is exercised.
    target_sed = (jax.random.uniform(k4, (B, T, C_SED)) < 0.4).astype(jnp.float32)
    frame_keep = (jax.random.uniform(k5, (B, T, 1)) < 0.5).astype(jnp.float32)
    target_sed = target_sed * frame_keep
    target_sed = target_sed.at[0, 0, 0].set(1.0)   # at least one nonzero frame

    out = hms_sed_1d_loss(y, y_sed, target, target_sed)
    out = jax.block_until_ready(out)

    ref = _reference(y, y_sed, target, target_sed)
    assert jnp.allclose(out, ref, rtol=1e-5, atol=1e-5), (out, ref)

    print("KERNEL_OK")
</pallas_src>

<mosaic_0001>
module attributes {stable_mosaic.version = 11 : i64} {
  func.func @_hms_loss_kernel(%arg0: i32, %arg1: memref<2x6xf32, #tpu.memory_space<vmem>>, %arg2: memref<2x6xf32, #tpu.memory_space<vmem>>, %arg3: memref<2x6x8xf32, #tpu.memory_space<vmem>>, %arg4: memref<2x16x6xf32, #tpu.memory_space<vmem>>, %arg5: memref<1x1xf32, #tpu.memory_space<vmem>>, %arg6: memref<1x1xf32, #tpu.memory_space<vmem>>, %arg7: memref<1x1xf32, #tpu.memory_space<vmem>>, %arg8: memref<1xi32, #tpu.memory_space<smem>>) attributes {dimension_semantics = [#tpu.dimension_semantics<arbitrary>], iteration_bounds = array<i64: 1>, scalar_prefetch = 0 : i64, scratch_operands = 3 : i64, tpu.core_type = #tpu.core_type<tc>, window_params = [{pipeline_mode = #tpu.pipeline_mode<synchronous>, transform_indices = @transform_0, window_bounds = array<i64: 2, 6>}, {pipeline_mode = #tpu.pipeline_mode<synchronous>, transform_indices = @transform_1, window_bounds = array<i64: 2, 6>}, {transform_indices = @transform_2, window_bounds = array<i64: 2, 6, 8>}, {transform_indices = @transform_3, window_bounds = array<i64: 2, 16, 6>}, {pipeline_mode = #tpu.pipeline_mode<synchronous>, transform_indices = @transform_4, window_bounds = array<i64: 1, 1>}]} {
    %c0_i32 = arith.constant 0 : i32
    %0 = arith.cmpi eq, %arg0, %c0_i32 : i32
    %1 = arith.extui %0 : i1 to i32
    %c0_i32_0 = arith.constant 0 : i32
    %2 = arith.cmpi ne, %1, %c0_i32_0 : i32
    scf.if %2 {
      %c0_27 = arith.constant 0 : index
      %c0_28 = arith.constant 0 : index
      %63 = vector.load %arg1[%c0_27, %c0_28] : memref<2x6xf32, #tpu.memory_space<vmem>>, vector<2x6xf32>
      %c0_29 = arith.constant 0 : index
      %c0_30 = arith.constant 0 : index
      %64 = vector.load %arg2[%c0_29, %c0_30] : memref<2x6xf32, #tpu.memory_space<vmem>>, vector<2x6xf32>
      %cst_31 = arith.constant dense<0xFF800000> : vector<2xf32>
      %65 = vector.multi_reduction <maximumf>, %63, %cst_31 [1] : vector<2x6xf32> to vector<2xf32>
      %66 = vector.shape_cast %65 : vector<2xf32> to vector<2x1xf32>
      %67 = vector.broadcast %66 : vector<2x1xf32> to vector<2x6xf32>
      %68 = arith.subf %63, %67 : vector<2x6xf32>
      %69 = math.exp %68 : vector<2x6xf32>
      %cst_32 = arith.constant dense<0.000000e+00> : vector<2xf32>
      %70 = vector.multi_reduction <add>, %69, %cst_32 [1] : vector<2x6xf32> to vector<2xf32>
      %71 = vector.shape_cast %70 : vector<2xf32> to vector<2x1xf32>
      %72 = math.log %71 : vector<2x1xf32>
      %73 = vector.broadcast %72 : vector<2x1xf32> to vector<2x6xf32>
      %74 = arith.subf %68, %73 : vector<2x6xf32>
      %cst_33 = arith.constant 0.000000e+00 : f32
      %75 = vector.broadcast %cst_33 : f32 to vector<2x6xf32>
      %76 = arith.cmpf ogt, %64, %75 : vector<2x6xf32>
      %cst_34 = arith.constant 0.000000e+00 : f32
      %77 = vector.broadcast %cst_34 : f32 to vector<2x6xf32>
      %78 = arith.cmpf ogt, %64, %77 : vector<2x6xf32>
      %cst_35 = arith.constant 1.000000e+00 : f32
      %79 = vector.broadcast %cst_35 : f32 to vector<2x6xf32>
      %80 = arith.select %78, %64, %79 : vector<2x6xi1>, vector<2x6xf32>
      %81 = math.log %80 : vector<2x6xf32>
      %82 = arith.mulf %64, %81 : vector<2x6xf32>
      %cst_36 = arith.constant 0.000000e+00 : f32
      %83 = vector.broadcast %cst_36 : f32 to vector<2x6xf32>
      %84 = arith.select %76, %82, %83 : vector<2x6xi1>, vector<2x6xf32>
      %cst_37 = arith.constant 0.000000e+00 : f32
      %85 = vector.broadcast %cst_37 : f32 to vector<2x6xf32>
      %86 = arith.maximumf %63, %85 : vector<2x6xf32>
      %87 = arith.mulf %63, %64 : vector<2x6xf32>
      %88 = arith.subf %86, %87 : vector<2x6xf32>
      %89 = math.absf %63 : vector<2x6xf32>
      %cst_38 = arith.constant 0.000000e+00 : f32
      %90 = vector.broadcast %cst_38 : f32 to vector<2x6xf32>
      %91 = arith.subf %90, %89 : vector<2x6xf32>
      %92 = math.exp %91 : vector<2x6xf32>
      %cst_39 = arith.constant 1.000000e+00 : f32
      %93 = vector.broadcast %cst_39 : f32 to vector<2x6xf32>
      %94 = arith.addf %93, %92 : vector<2x6xf32>
      %95 = math.log %94 : vector<2x6xf32>
      %96 = arith.addf %88, %95 : vector<2x6xf32>
      %97 = arith.mulf %64, %74 : vector<2x6xf32>
      %98 = arith.subf %84, %97 : vector<2x6xf32>
      %cst_40 = arith.constant 5.000000e-01 : f32
      %99 = vector.broadcast %cst_40 : f32 to vector<2x6xf32>
      %100 = arith.mulf %99, %98 : vector<2x6xf32>
      %cst_41 = arith.constant 0.0416666679 : f32
      %101 = vector.broadcast %cst_41 : f32 to vector<2x6xf32>
      %102 = arith.mulf %101, %96 : vector<2x6xf32>
      %103 = arith.addf %100, %102 : vector<2x6xf32>
      %104 = vector.shape_cast %103 : vector<2x6xf32> to vector<1x2x6xf32>
      %cst_42 = arith.constant dense<0.000000e+00> : vector<1xf32>
      %105 = vector.multi_reduction <add>, %104, %cst_42 [1, 2] : vector<1x2x6xf32> to vector<1xf32>
      %106 = vector.shape_cast %105 : vector<1xf32> to vector<1x1x1xf32>
      %107 = vector.extract %106[0, 0, 0] : f32 from vector<1x1x1xf32>
      %108 = vector.broadcast %107 : f32 to vector<1x1xf32>
      %c0_43 = arith.constant 0 : index
      %c0_44 = arith.constant 0 : index
      %109 = vector.load %arg6[%c0_43, %c0_44] : memref<1x1xf32, #tpu.memory_space<vmem>>, vector<1x1xf32>
      tpu.vector_store %arg6[%c0_43, %c0_44], %108 {strides = array<i32>} : memref<1x1xf32, #tpu.memory_space<vmem>>, vector<1x1xf32>,
      %cst_45 = arith.constant 0.000000e+00 : f32
      %110 = vector.broadcast %cst_45 : f32 to vector<1x1xf32>
      %c0_46 = arith.constant 0 : index
      %c0_47 = arith.constant 0 : index
      %111 = vector.load %arg7[%c0_46, %c0_47] : memref<1x1xf32, #tpu.memory_space<vmem>>, vector<1x1xf32>
      tpu.vector_store %arg7[%c0_46, %c0_47], %110 {strides = array<i32>} : memref<1x1xf32, #tpu.memory_space<vmem>>, vector<1x1xf32>,
      %c0_i32_48 = arith.constant 0 : i32
      %c0_49 = arith.constant 0 : index
      %112 = memref.load %arg8[%c0_49] : memref<1xi32, #tpu.memory_space<smem>>
      memref.store %c0_i32_48, %arg8[%c0_49] : memref<1xi32, #tpu.memory_space<smem>>
    } else {
    }
    %c0 = arith.constant 0 : index
    %c0_1 = arith.constant 0 : index
    %c0_2 = arith.constant 0 : index
    %3 = vector.load %arg3[%c0, %c0_1, %c0_2] : memref<2x6x8xf32, #tpu.memory_space<vmem>>, vector<2x6x8xf32>
    %cst = arith.constant 0.000000e+00 : f32
    %4 = vector.broadcast %cst : f32 to vector<2x6x8xf32>
    %5 = arith.maximumf %3, %4 : vector<2x6x8xf32>
    %6 = math.absf %3 : vector<2x6x8xf32>
    %cst_3 = arith.constant 0.000000e+00 : f32
    %7 = vector.broadcast %cst_3 : f32 to vector<2x6x8xf32>
    %8 = arith.subf %7, %6 : vector<2x6x8xf32>
    %9 = math.exp %8 : vector<2x6x8xf32>
    %cst_4 = arith.constant 1.000000e+00 : f32
    %10 = vector.broadcast %cst_4 : f32 to vector<2x6x8xf32>
    %11 = arith.addf %10, %9 : vector<2x6x8xf32>
    %12 = math.log %11 : vector<2x6x8xf32>
    %13 = arith.addf %5, %12 : vector<2x6x8xf32>
    %cst_5 = arith.constant 0.000000e+00 : f32
    %14 = vector.broadcast %cst_5 : f32 to vector<2x8x1xf32>
    %cst_6 = arith.constant 0.000000e+00 : f32
    %15 = vector.broadcast %cst_6 : f32 to vector<2x8x6xf32>
    %c0_i32_7 = arith.constant 0 : i32
    %16 = vector.broadcast %c0_i32_7 : i32 to vector<2x8x1xi32>
    %c0_8 = arith.constant 0 : index
    %c0_9 = arith.constant 0 : index
    %c0_10 = arith.constant 0 : index
    %17 = tpu.strided_load %arg4[%c0_8, %c0_9, %c0_10] {strides = array<i32: 1, 2, 1>} : memref<2x16x6xf32, #tpu.memory_space<vmem>>, vector<2x8x6xf32>
    %cst_11 = arith.constant dense<0.000000e+00> : vector<2x8xf32>
    %18 = vector.multi_reduction <add>, %17, %cst_11 [2] : vector<2x8x6xf32> to vector<2x8xf32>
    %19 = vector.shape_cast %18 : vector<2x8xf32> to vector<2x8x1xf32>
    %20 = arith.addf %14, %19 : vector<2x8x1xf32>
    %21 = vector.broadcast %19 : vector<2x8x1xf32> to vector<2x8x6xf32>
    %22 = arith.mulf %17, %21 : vector<2x8x6xf32>
    %23 = arith.addf %15, %22 : vector<2x8x6xf32>
    %cst_12 = arith.constant 0.000000e+00 : f32
    %24 = vector.broadcast %cst_12 : f32 to vector<2x8x1xf32>
    %25 = arith.cmpf one, %19, %24 : vector<2x8x1xf32>
    %26 = arith.extui %25 : vector<2x8x1xi1> to vector<2x8x1xi32>
    %27 = arith.addi %16, %26 : vector<2x8x1xi32>
    %c0_13 = arith.constant 0 : index
    %c1 = arith.constant 1 : index
    %c0_14 = arith.constant 0 : index
    %28 = tpu.strided_load %arg4[%c0_13, %c1, %c0_14] {strides = array<i32: 1, 2, 1>} : memref<2x16x6xf32, #tpu.memory_space<vmem>>, vector<2x8x6xf32>
    %cst_15 = arith.constant dense<0.000000e+00> : vector<2x8xf32>
    %29 = vector.multi_reduction <add>, %28, %cst_15 [2] : vector<2x8x6xf32> to vector<2x8xf32>
    %30 = vector.shape_cast %29 : vector<2x8xf32> to vector<2x8x1xf32>
    %31 = arith.addf %20, %30 : vector<2x8x1xf32>
    %32 = vector.broadcast %30 : vector<2x8x1xf32> to vector<2x8x6xf32>
    %33 = arith.mulf %28, %32 : vector<2x8x6xf32>
    %34 = arith.addf %23, %33 : vector<2x8x6xf32>
    %cst_16 = arith.constant 0.000000e+00 : f32
    %35 = vector.broadcast %cst_16 : f32 to vector<2x8x1xf32>
    %36 = arith.cmpf one, %30, %35 : vector<2x8x1xf32>
    %37 = arith.extui %36 : vector<2x8x1xi1> to vector<2x8x1xi32>
    %38 = arith.addi %27, %37 : vector<2x8x1xi32>
    %39 = tpu.transpose %31, [0, 2, 1] : vector<2x8x1xf32> -> vector<2x1x8xf32>
    %40 = tpu.transpose %34, [0, 2, 1] : vector<2x8x6xf32> -> vector<2x6x8xf32>
    %41 = vector.broadcast %39 : vector<2x1x8xf32> to vector<2x6x8xf32>
    %42 = arith.mulf %13, %41 : vector<2x6x8xf32>
    %43 = arith.mulf %3, %40 : vector<2x6x8xf32>
    %44 = arith.subf %42, %43 : vector<2x6x8xf32>
    %45 = vector.shape_cast %44 : vector<2x6x8xf32> to vector<1x2x6x8xf32>
    %cst_17 = arith.constant dense<0.000000e+00> : vector<1xf32>
    %46 = vector.multi_reduction <add>, %45, %cst_17 [1, 2, 3] : vector<1x2x6x8xf32> to vector<1xf32>
    %47 = vector.shape_cast %46 : vector<1xf32> to vector<1x1x1x1xf32>
    %48 = vector.extract %47[0, 0, 0, 0] : f32 from vector<1x1x1x1xf32>
    %c0_18 = arith.constant 0 : index
    %c0_19 = arith.constant 0 : index
    %49 = vector.load %arg7[%c0_18, %c0_19] : memref<1x1xf32, #tpu.memory_space<vmem>>, vector<1x1xf32>
    %50 = vector.broadcast %48 : f32 to vector<1x1xf32>
    %51 = arith.addf %49, %50 : vector<1x1xf32>
    %c0_20 = arith.constant 0 : index
    %c0_21 = arith.constant 0 : index
    %52 = vector.load %arg7[%c0_20, %c0_21] : memref<1x1xf32, #tpu.memory_space<vmem>>, vector<1x1xf32>
    tpu.vector_store %arg7[%c0_20, %c0_21], %51 {strides = array<i32>} : memref<1x1xf32, #tpu.memory_space<vmem>>, vector<1x1xf32>,
    %c0_22 = arith.constant 0 : index
    %53 = memref.load %arg8[%c0_22] : memref<1xi32, #tpu.memory_space<smem>>
    %54 = vector.shape_cast %38 : vector<2x8x1xi32> to vector<1x2x8x1xi32>
    %cst_23 = arith.constant dense<0> : vector<1xi32>
    %55 = vector.multi_reduction <add>, %54, %cst_23 [1, 2, 3] : vector<1x2x8x1xi32> to vector<1xi32>
    %56 = vector.shape_cast %55 : vector<1xi32> to vector<1x1x1x1xi32>
    %57 = vector.extract %56[0, 0, 0, 0] : i32 from vector<1x1x1x1xi32>
    %58 = arith.addi %53, %57 : i32
    %c0_24 = arith.constant 0 : index
    %59 = memref.load %arg8[%c0_24] : memref<1xi32, #tpu.memory_space<smem>>
    memref.store %58, %arg8[%c0_24] : memref<1xi32, #tpu.memory_space<smem>>
    %c0_i32_25 = arith.constant 0 : i32
    %60 = arith.cmpi eq, %arg0, %c0_i32_25 : i32
    %61 = arith.extui %60 : i1 to i32
    %c0_i32_26 = arith.constant 0 : i32
    %62 = arith.cmpi ne, %61, %c0_i32_26 : i32
    scf.if %62 {
      %c0_27 = arith.constant 0 : index
      %63 = memref.load %arg8[%c0_27] : memref<1xi32, #tpu.memory_space<smem>>
      %64 = vector.broadcast %63 : i32 to vector<1x1xi32>
      %65 = arith.sitofp %64 : vector<1x1xi32> to vector<1x1xf32>
      %66 = tpu.reciprocal %65 {approx = true} : vector<1x1xf32> -> vector<1x1xf32>
      %67 = arith.mulf %65, %66 : vector<1x1xf32>
      %cst_28 = arith.constant 2.000000e+00 : f32
      %68 = vector.broadcast %cst_28 : f32 to vector<1x1xf32>
      %69 = arith.subf %68, %67 : vector<1x1xf32>
      %70 = arith.mulf %66, %69 : vector<1x1xf32>
      %c0_29 = arith.constant 0 : index
      %c0_30 = arith.constant 0 : index
      %71 = vector.load %arg6[%c0_29, %c0_30] : memref<1x1xf32, #tpu.memory_space<vmem>>, vector<1x1xf32>
      %c0_31 = arith.constant 0 : index
      %c0_32 = arith.constant 0 : index
      %72 = vector.load %arg7[%c0_31, %c0_32] : memref<1x1xf32, #tpu.memory_space<vmem>>, vector<1x1xf32>
      %cst_33 = arith.constant 5.000000e-01 : f32
      %73 = vector.broadcast %cst_33 : f32 to vector<1x1xf32>
      %74 = arith.mulf %73, %72 : vector<1x1xf32>
      %75 = arith.mulf %74, %70 : vector<1x1xf32>
      %76 = arith.addf %71, %75 : vector<1x1xf32>
      %c0_34 = arith.constant 0 : index
      %c0_35 = arith.constant 0 : index
      %77 = vector.load %arg5[%c0_34, %c0_35] : memref<1x1xf32, #tpu.memory_space<vmem>>, vector<1x1xf32>
      tpu.vector_store %arg5[%c0_34, %c0_35], %76 {strides = array<i32>} : memref<1x1xf32, #tpu.memory_space<vmem>>, vector<1x1xf32>,
    } else {
    }
    return
  }
  func.func @transform_0(%arg0: i32) -> (i32, i32) {
    %c0_i32 = arith.constant 0 : i32
    %c0_i32_0 = arith.constant 0 : i32
    %c0_i32_1 = arith.constant 0 : i32
    return %c0_i32, %c0_i32_0 : i32, i32
  }
  func.func @transform_1(%arg0: i32) -> (i32, i32) {
    %c0_i32 = arith.constant 0 : i32
    %c0_i32_0 = arith.constant 0 : i32
    %c0_i32_1 = arith.constant 0 : i32
    return %c0_i32, %c0_i32_0 : i32, i32
  }
  func.func @transform_2(%arg0: i32) -> (i32, i32, i32) {
    %c0_i32 = arith.constant 0 : i32
    %c0_i32_0 = arith.constant 0 : i32
    %c0_i32_1 = arith.constant 0 : i32
    return %c0_i32, %c0_i32_0, %arg0 : i32, i32, i32
  }
  func.func @transform_3(%arg0: i32) -> (i32, i32, i32) {
    %c0_i32 = arith.constant 0 : i32
    %c0_i32_0 = arith.constant 0 : i32
    %c0_i32_1 = arith.constant 0 : i32
    return %c0_i32, %arg0, %c0_i32_0 : i32, i32, i32
  }
  func.func @transform_4(%arg0: i32) -> (i32, i32) {
    %c0_i32 = arith.constant 0 : i32
    %c0_i32_0 = arith.constant 0 : i32
    %c0_i32_1 = arith.constant 0 : i32
    return %c0_i32, %c0_i32_0 : i32, i32
  }
}

</mosaic_0001>

<llo_original>
// kernel: tpu_custom_call.1
$region0: #{tpu_custom_call.1}
  #allocation0 [shape = 'u32[]', space=smem, size = 0x4, offset = 0x4, fixed_abs, tag = 'smem constant byte address 0x4 - core index']
  #allocation1 [shape = 'u32[144,128]{1,0:T(1,128)}', space=vmem, size = 0x12000, scoped, tag = 'internal scratch']
  #allocation2 [shape = 'f32[1,1]{1,0:T(1,128)}', space=vmem, size = 0x200, scoped, tag = 'scratch operand']
  #allocation3 [shape = 'f32[1,1]{1,0:T(1,128)}', space=vmem, size = 0x200, scoped, tag = 'scratch operand']
  #allocation4 [shape = 's32[1]{0:T(128)}', space=smem, size = 0x200, scoped, tag = 'scratch operand']
  %s0 = inlined_call_operand.vmem [shape: f32[2,6], index: 0, kind: input, shape index: {}]
  %s1 = inlined_call_operand.vmem [shape: f32[2,6], index: 1, kind: input, shape index: {}]
  %s2 = inlined_call_operand.vmem [shape: f32[2,6,8], index: 2, kind: input, shape index: {}]
  %s3 = inlined_call_operand.vmem [shape: f32[2,16,6], index: 3, kind: input, shape index: {}]
  %s4 = inlined_call_operand.hbm [shape: f32[1,1], index: 4, kind: output, shape index: {}]
  %s5 = sld [smem:[#allocation0]]
  $region34: #{tpu_custom_call.1} parent=0
    _
  %s7 = ssub.s32 1, %s5
  %s8 = scalar_select 0, %s7, %s5
  $region1: #{tpu_custom_call.1} parent=0
    #allocation5 [shape = 'u8[512]{0}', space=vmem, size = 0x400, scoped, tag = 'output window, operand 0, single buffered']
    #allocation6 [shape = 's32[1]{0}', space=sflag, size = 0x4, scoped, tag = 'scoped memory for tpu_custom_call.1']
    %9 = vsyncpa [#allocation6], 0
    // Predicated region
    $region2: #{tpu_custom_call.1} parent=1 // pred_check
      _
    $region3: #{tpu_custom_call.1} parent=1 // pred_check_branch
      %11 = sbr.rel (0) target = $region5
    $region4: #{tpu_custom_call.1} parent=1 // pred_region
      _
    $region5: #{tpu_custom_call.1} parent=1 // pred_fallthru
      _
    // Predicated region
    $region6: #{tpu_custom_call.1} parent=1 // pred_check
      _
    $region7: #{tpu_custom_call.1} parent=1 // pred_check_branch
      %13 = sbr.rel (0) target = $region9
    $region8: #{tpu_custom_call.1} parent=1 // pred_region
      _
    $region9: #{tpu_custom_call.1} parent=1 // pred_fallthru
      _
    // Predicated region
    $region10: #{tpu_custom_call.1} parent=1 // pred_check
      _
    $region11: #{tpu_custom_call.1} parent=1 // pred_check_branch
      %15 = sbr.rel (0) target = $region13
    $region12: #{tpu_custom_call.1} parent=1 // pred_region
      _
    $region13: #{tpu_custom_call.1} parent=1 // pred_fallthru
      _
    // Predicated region
    $region14: #{tpu_custom_call.1} parent=1 // pred_check
      _
    $region15: #{tpu_custom_call.1} parent=1 // pred_check_branch
      %17 = sbr.rel (0) target = $region17
    $region16: #{tpu_custom_call.1} parent=1 // pred_region
      _
    $region17: #{tpu_custom_call.1} parent=1 // pred_fallthru
      _
    %p18 = scmp.eq.s32.totalorder 0, 0
    // Predicated region
    $region18: #{tpu_custom_call.1} parent=1 // pred_check
      %p19 = pneg %p18
    $region19: #{tpu_custom_call.1} parent=1 // pred_check_branch
      %21 = sbr.rel (%p19) target = $region21
    $region20: #{tpu_custom_call.1} parent=1 // pred_region
      %v22 = vld [vmem:[%s0] sm:$0x3]
      %v23 = vld [vmem:[%s1] sm:$0x3]
      %vm24 = vcmask 41984
      %v25 = vsel %vm24, %v22, -inf
      %26 = vmax.xlane.f32.xlu0 %v25
      %v27 = vpop.xlane.xlu0 %26
      %v28 = vsub.f32 %v22, %v27
      %v29 = vmul.f32 %v28, 1.442695
      %v30 = vpow.pop %v29
      %v31 = vsel %vm24, %v30, 0.0
      %32 = vadd.xlane.f32.xlu0 %v31
      %v33 = vpop.xlane.xlu0 %32
      %v34 = vlog2.pop %v33
      %v35 = vmul.f32 %v34, 0.6931472
      %v36 = vsub.f32 %v28, %v35
      %vm37 = vcmp.gt.f32.partialorder %v23, 0.0
      %v38 = vsel %vm37, %v23, 1.0
      %v39 = vlog2.pop %v38
      %v40 = vmul.f32 %v39, 0.6931472
      %v41 = vmul.f32 %v23, %v40
      %v42 = vsel %vm37, %v41, 0.0
      %v43 = vmax.f32 %v22, 0.0
      %v44 = vmul.f32 %v22, %v23
      %v45 = vsub.f32 %v43, %v44
      %v46 = vand.u32 2147483647, %v22
      %v47 = vsub.f32 0.0, %v46
      %v48 = vmul.f32 %v47, 1.442695
      %v49 = vpow.pop %v48
      %v50 = vadd.f32 %v49, 1.0
      %v51 = vlog2.pop %v50
      %v52 = vmul.f32 %v51, 0.6931472
      %v53 = vadd.f32 %v45, %v52
      %v54 = vmul.f32 %v23, %v36
      %v55 = vsub.f32 %v42, %v54
      %v56 = vmul.f32 %v55, 0.5
      %v57 = vmul.f32 %v53, 0.041666668
      %v58 = vadd.f32 %v56, %v57
      %v59 = vsel %vm24, %v58, 0.0
      %60 = vadd.xlane.f32.xlu0 %v59
      %v61 = vpop.xlane.xlu0 %60
      %v62 = vrot.slane %v61, 4
      %v63 = vadd.f32 %v61, %v62
      %v64 = vrot.slane %v63, 2
      %v65 = vadd.f32 %v63, %v64
      %v66 = vrot.slane %v65, 1
      %v67 = vadd.f32 %v65, %v66
      %s68 = vtos %v67
      %v69 = vstv %s68
      %vm70 = vcmask 0
      %71 = vst.msk [vmem:[#allocation2] sm:$0x1] %vm70, %v69
      %72 = vst.msk [vmem:[#allocation3] sm:$0x1] %vm70, 0.0
      %s73 = scalar_lea.smem [#allocation4], 0
      %74 = sst [smem:[%s73]] 0
    $region21: #{tpu_custom_call.1} parent=1 // pred_fallthru
      _
    %v75 = vld [vmem:[%s2] sm:$0x3f]
    %v76 = vld [vmem:[%s2 + $0x8] sm:$0x3f]
    %v77 = vmax.f32 %v75, 0.0
    %v78 = vmax.f32 %v76, 0.0
    %v79 = vand.u32 2147483647, %v75
    %v80 = vand.u32 2147483647, %v76
    %v81 = vsub.f32 0.0, %v79
    %v82 = vsub.f32 0.0, %v80
    %v83 = vmul.f32 %v81, 1.442695
    %v84 = vpow.pop %v83
    %v85 = vmul.f32 %v82, 1.442695
    %v86 = vpow.pop %v85
    %v87 = vadd.f32 %v84, 1.0
    %v88 = vadd.f32 %v86, 1.0
    %v89 = vlog2.pop %v87
    %v90 = vmul.f32 %v89, 0.6931472
    %v91 = vlog2.pop %v88
    %v92 = vmul.f32 %v91, 0.6931472
    %v93 = vadd.f32 %v77, %v90
    %v94 = vadd.f32 %v78, %v92
    %v95 = vld [vmem:[%s3] ss:$2 sm:$0xff]
    %s96 = scalar_lea.vmem %s3, 16
    %v97 = vld [vmem:[%s96] ss:$2 sm:$0xff]
    %vm98 = vcmask 48128
    %v99 = vsel %vm98, %v95, 0.0
    %100 = vadd.xlane.f32.xlu0 %v99
    %v101 = vpop.xlane.xlu0 %100
    %v102 = vsel %vm98, %v97, 0.0
    %103 = vadd.xlane.f32.xlu0 %v102
    %v104 = vpop.xlane.xlu0 %103
    %v105 = vadd.f32 %v101, 0.0
    %v106 = vadd.f32 %v104, 0.0
    %v107 = vmul.f32 %v95, %v101
    %v108 = vmul.f32 %v97, %v104
    %v109 = vadd.f32 %v107, 0.0
    %v110 = vadd.f32 %v108, 0.0
    %vm111 = vcmp.ne.f32.partialorder %v101, 0.0
    %vm112 = vcmp.ne.f32.partialorder %v104, 0.0
    %v113 = vsel %vm111, 1, 0
    %v114 = vsel %vm112, 1, 0
    %s115 = scalar_lea.vmem %s3, 1
    %v116 = vld [vmem:[%s115] ss:$2 sm:$0xff]
    %s117 = scalar_lea.vmem %s3, 17
    %v118 = vld [vmem:[%s117] ss:$2 sm:$0xff]
    %v119 = vsel %vm98, %v116, 0.0
    %120 = vadd.xlane.f32.xlu0 %v119
    %v121 = vpop.xlane.xlu0 %120
    %v122 = vsel %vm98, %v118, 0.0
    %123 = vadd.xlane.f32.xlu0 %v122
    %v124 = vpop.xlane.xlu0 %123
    %v125 = vadd.f32 %v105, %v121
    %v126 = vadd.f32 %v106, %v124
    %v127 = vmul.f32 %v116, %v121
    %v128 = vmul.f32 %v118, %v124
    %v129 = vadd.f32 %v109, %v127
    %v130 = vadd.f32 %v110, %v128
    %vm131 = vcmp.ne.f32.partialorder %v121, 0.0
    %vm132 = vcmp.ne.f32.partialorder %v124, 0.0
    %v133 = vsel %vm131, 1, 0
    %v134 = vsel %vm132, 1, 0
    %v135 = vadd.s32 %v113, %v133
    %v136 = vadd.s32 %v114, %v134
    %137 = vxpose.xlu0.b32.start [1/16] %v125, 128
    %138 = vxpose.xlu0.b32.cont [2/16] 0.0, 128
    %139 = vxpose.xlu0.b32.cont [3/16] 0.0, 128
    %140 = vxpose.xlu0.b32.cont [4/16] 0.0, 128
    %141 = vxpose.xlu0.b32.cont [5/16] 0.0, 128
    %142 = vxpose.xlu0.b32.cont [6/16] 0.0, 128
    %143 = vxpose.xlu0.b32.cont [7/16] 0.0, 128
    %144 = vxpose.xlu0.b32.cont [8/16] 0.0, 128
    %145 = vxpose.xlu0.b32.cont [9/16] 0.0, 128
    %146 = vxpose.xlu0.b32.cont [10/16] 0.0, 128
    %147 = vxpose.xlu0.b32.cont [11/16] 0.0, 128
    %148 = vxpose.xlu0.b32.cont [12/16] 0.0, 128
    %149 = vxpose.xlu0.b32.cont [13/16] 0.0, 128
    %150 = vxpose.xlu0.b32.cont [14/16] 0.0, 128
    %151 = vxpose.xlu0.b32.cont [15/16] 0.0, 128
    %152 = vxpose.xlu0.b32.end [16/16] 0.0, 128
    %v153 = vpop.trf.xlu0
    %v154 = vpop.trf.xlu0
    %v155 = vpop.trf.xlu0
    %v156 = vpop.trf.xlu0
    %v157 = vpop.trf.xlu0
    %v158 = vpop.trf.xlu0
    %v159 = vpop.trf.xlu0
    %v160 = vpop.trf.xlu0
    %v161 = vpop.trf.xlu0
    %v162 = vpop.trf.xlu0
    %v163 = vpop.trf.xlu0
    %v164 = vpop.trf.xlu0
    %v165 = vpop.trf.xlu0
    %v166 = vpop.trf.xlu0
    %v167 = vpop.trf.xlu0
    %v168 = vpop.trf.xlu0
    %169 = vxpose.xlu0.b32.start [1/16] %v126, 128
    %170 = vxpose.xlu0.b32.cont [2/16] 0.0, 128
    %171 = vxpose.xlu0.b32.cont [3/16] 0.0, 128
    %172 = vxpose.xlu0.b32.cont [4/16] 0.0, 128
    %173 = vxpose.xlu0.b32.cont [5/16] 0.0, 128
    %174 = vxpose.xlu0.b32.cont [6/16] 0.0, 128
    %175 = vxpose.xlu0.b32.cont [7/16] 0.0, 128
    %176 = vxpose.xlu0.b32.cont [8/16] 0.0, 128
    %177 = vxpose.xlu0.b32.cont [9/16] 0.0, 128
    %178 = vxpose.xlu0.b32.cont [10/16] 0.0, 128
    %179 = vxpose.xlu0.b32.cont [11/16] 0.0, 128
    %180 = vxpose.xlu0.b32.cont [12/16] 0.0, 128
    %181 = vxpose.xlu0.b32.cont [13/16] 0.0, 128
    %182 = vxpose.xlu0.b32.cont [14/16] 0.0, 128
    %183 = vxpose.xlu0.b32.cont [15/16] 0.0, 128
    %184 = vxpose.xlu0.b32.end [16/16] 0.0, 128
    %v185 = vpop.trf.xlu0
    %v186 = vpop.trf.xlu0
    %v187 = vpop.trf.xlu0
    %v188 = vpop.trf.xlu0
    %v189 = vpop.trf.xlu0
    %v190 = vpop.trf.xlu0
    %v191 = vpop.trf.xlu0
    %v192 = vpop.trf.xlu0
    %v193 = vpop.trf.xlu0
    %v194 = vpop.trf.xlu0
    %v195 = vpop.trf.xlu0
    %v196 = vpop.trf.xlu0
    %v197 = vpop.trf.xlu0
    %v198 = vpop.trf.xlu0
    %v199 = vpop.trf.xlu0
    %v200 = vpop.trf.xlu0
    %201 = vxpose.xlu0.b32.start [1/16] %v129, 128
    %202 = vxpose.xlu0.b32.cont [2/16] 0.0, 128
    %203 = vxpose.xlu0.b32.cont [3/16] 0.0, 128
    %204 = vxpose.xlu0.b32.cont [4/16] 0.0, 128
    %205 = vxpose.xlu0.b32.cont [5/16] 0.0, 128
    %206 = vxpose.xlu0.b32.cont [6/16] 0.0, 128
    %207 = vxpose.xlu0.b32.cont [7/16] 0.0, 128
    %208 = vxpose.xlu0.b32.cont [8/16] 0.0, 128
    %209 = vxpose.xlu0.b32.cont [9/16] 0.0, 128
    %210 = vxpose.xlu0.b32.cont [10/16] 0.0, 128
    %211 = vxpose.xlu0.b32.cont [11/16] 0.0, 128
    %212 = vxpose.xlu0.b32.cont [12/16] 0.0, 128
    %213 = vxpose.xlu0.b32.cont [13/16] 0.0, 128
    %214 = vxpose.xlu0.b32.cont [14/16] 0.0, 128
    %215 = vxpose.xlu0.b32.cont [15/16] 0.0, 128
    %216 = vxpose.xlu0.b32.end [16/16] 0.0, 128
    %v217 = vpop.trf.xlu0
    %v218 = vpop.trf.xlu0
    %v219 = vpop.trf.xlu0
    %v220 = vpop.trf.xlu0
    %v221 = vpop.trf.xlu0
    %v222 = vpop.trf.xlu0
    %v223 = vpop.trf.xlu0
    %v224 = vpop.trf.xlu0
    %v225 = vpop.trf.xlu0
    %v226 = vpop.trf.xlu0
    %v227 = vpop.trf.xlu0
    %v228 = vpop.trf.xlu0
    %v229 = vpop.trf.xlu0
    %v230 = vpop.trf.xlu0
    %v231 = vpop.trf.xlu0
    %v232 = vpop.trf.xlu0
    %233 = vxpose.xlu0.b32.start [1/16] %v130, 128
    %234 = vxpose.xlu0.b32.cont [2/16] 0.0, 128
    %235 = vxpose.xlu0.b32.cont [3/16] 0.0, 128
    %236 = vxpose.xlu0.b32.cont [4/16] 0.0, 128
    %237 = vxpose.xlu0.b32.cont [5/16] 0.0, 128
    %238 = vxpose.xlu0.b32.cont [6/16] 0.0, 128
    %239 = vxpose.xlu0.b32.cont [7/16] 0.0, 128
    %240 = vxpose.xlu0.b32.cont [8/16] 0.0, 128
    %241 = vxpose.xlu0.b32.cont [9/16] 0.0, 128
    %242 = vxpose.xlu0.b32.cont [10/16] 0.0, 128
    %243 = vxpose.xlu0.b32.cont [11/16] 0.0, 128
    %244 = vxpose.xlu0.b32.cont [12/16] 0.0, 128
    %245 = vxpose.xlu0.b32.cont [13/16] 0.0, 128
    %246 = vxpose.xlu0.b32.cont [14/16] 0.0, 128
    %247 = vxpose.xlu0.b32.cont [15/16] 0.0, 128
    %248 = vxpose.xlu0.b32.end [16/16] 0.0, 128
    %v249 = vpop.trf.xlu0
    %v250 = vpop.trf.xlu0
    %v251 = vpop.trf.xlu0
    %v252 = vpop.trf.xlu0
    %v253 = vpop.trf.xlu0
    %v254 = vpop.trf.xlu0
    %v255 = vpop.trf.xlu0
    %v256 = vpop.trf.xlu0
    %v257 = vpop.trf.xlu0
    %v258 = vpop.trf.xlu0
    %v259 = vpop.trf.xlu0
    %v260 = vpop.trf.xlu0
    %v261 = vpop.trf.xlu0
    %v262 = vpop.trf.xlu0
    %v263 = vpop.trf.xlu0
    %v264 = vpop.trf.xlu0
    %v265 = vlaneseq
    %v266 = vshrl.u32 %v265, 7
    %v267 = vsub.s32 0, %v266
    %v268 = vrot.slane %v153, %v267
    %v269 = vlaneseq
    %v270 = vshrl.u32 %v269, 7
    %v271 = vsub.s32 0, %v270
    %v272 = vrot.slane %v185, %v271
    %v273 = vmul.f32 %v93, %v268
    %v274 = vmul.f32 %v94, %v272
    %v275 = vmul.f32 %v75, %v217
    %v276 = vmul.f32 %v76, %v249
    %v277 = vsub.f32 %v273, %v275
    %v278 = vsub.f32 %v274, %v276
    %vm279 = vcmask 62464
    %v280 = vsel %vm279, %v277, 0.0
    %v281 = vsel %vm279, %v278, 0.0
    %v282 = vadd.f32 %v280, %v281
    %283 = vadd.xlane.f32.xlu0 %v282
    %v284 = vpop.xlane.xlu0 %283
    %v285 = vrot.slane %v284, 4
    %v286 = vadd.f32 %v284, %v285
    %v287 = vrot.slane %v286, 2
    %v288 = vadd.f32 %v286, %v287
    %v289 = vrot.slane %v288, 1
    %v290 = vadd.f32 %v288, %v289
    %s291 = vtos %v290
    %v292 = vld [vmem:[#allocation3] sm:$0x1]
    %v293 = vstv %s291
    %v294 = vadd.f32 %v292, %v293
    %vm295 = vcmask 0
    %296 = vst.msk [vmem:[#allocation3] sm:$0x1] %vm295, %v294
    %s297 = sld [smem:[#allocation4]]
    %v298 = vadd.s32 %v135, %v136
    %v299 = vrot.slane %v298, 4
    %v300 = vadd.s32 %v298, %v299
    %v301 = vrot.slane %v300, 2
    %v302 = vadd.s32 %v300, %v301
    %v303 = vrot.slane %v302, 1
    %v304 = vadd.s32 %v302, %v303
    %s305 = vtos %v304
    %s306 = sadd.s32 %s297, %s305
    %s307 = scalar_lea.smem [#allocation4], 0
    %308 = sst [smem:[%s307]] %s306
    // Predicated region
    $region22: #{tpu_custom_call.1} parent=1 // pred_check
      %p309 = pneg %p18
    $region23: #{tpu_custom_call.1} parent=1 // pred_check_branch
      %311 = sbr.rel (%p309) target = $region25
    $region24: #{tpu_custom_call.1} parent=1 // pred_region
      %s312 = sld [smem:[#allocation4]]
      %v313 = vstv %s312
      %v314 = vcvt.s32.f32 %v313
      %v315 = vrcp.pop %v314
      %v316 = vmul.f32 %v314, %v315
      %v317 = vsub.f32 2.0, %v316
      %v318 = vmul.f32 %v315, %v317
      %v319 = vld [vmem:[#allocation2] sm:$0x1]
      %v320 = vld [vmem:[#allocation3] sm:$0x1]
      %v321 = vmul.f32 %v320, 0.5
      %v322 = vmul.f32 %v321, %v318
      %v323 = vadd.f32 %v319, %v322
      %324 = vst.msk [vmem:[#allocation5] sm:$0x1] %vm295, %v323
    $region25: #{tpu_custom_call.1} parent=1 // pred_fallthru
      _
    // Predicated region
    $region26: #{tpu_custom_call.1} parent=1 // pred_check
      _
    $region27: #{tpu_custom_call.1} parent=1 // pred_check_branch
      %326 = sbr.rel (0) target = $region29
    $region28: #{tpu_custom_call.1} parent=1 // pred_region
      %s328 = ssub.s32 16, 16
      %329 = vsyncadd [#allocation6], %s328
      %s331 = sshll.u32 [#allocation5], 4
      %s332 = int_to_ptr.vmem [resolvable:$true] %s331
      %334 = dma.vmem_to_hbm [thread:$0]  %s332, 16, %s4, [#allocation6]
    $region29: #{tpu_custom_call.1} parent=1 // pred_fallthru
      _
    // Predicated region
    $region30: #{tpu_custom_call.1} parent=1 // pred_check
      _
    $region31: #{tpu_custom_call.1} parent=1 // pred_check_branch
      %336 = sbr.rel (0) target = $region33
    $region32: #{tpu_custom_call.1} parent=1 // pred_region
      %337 = dma.done [#allocation6], 16
    $region33: #{tpu_custom_call.1} parent=1 // pred_fallthru
      _
    %338 = vsyncpa [#allocation6], 1

</llo_original>
